<compile_context>
chip_gen: v5e
topology: v5e:2x2
jax: 0.10.0
libtpu: 0.0.40
codegen_flags: <defaults>
</compile_context>

<pallas_src>
from functools import partial

import jax
import jax.numpy as jnp
from jax.experimental import pallas as pl
from jax.experimental.pallas import tpu as pltpu


def _round_up(v, n):
    return ((v + n - 1) // n) * n


def _round_down(v, n):
    return (v // n) * n


def _pick_tb(batch):
    """Largest divisor of `batch` that is <= min(8, ceil(batch/2)).

    Divisor -> no batch padding; <= ceil(B/2) -> the 'parallel' batch grid axis has
    >= 2 steps whenever B >= 2, so v7x's second TensorCore is not idle.
    """
    cap = min(8, max(1, (batch + 1) // 2))
    tb = 1
    for d in range(1, cap + 1):
        if batch % d == 0:
            tb = d
    return tb


def _vmem_capacity_bytes():
    try:
        return int(pltpu.get_tpu_info().vmem_capacity_bytes)
    except Exception:
        return 64 * 2**20  # conservative (v7x-sized) fallback


def _make_kernel(S, TS, ragged):
    def kernel(x_ref, m_ref, w_ref, tok_ref, out_ref, num_acc, den_acc):
        # x_ref:   (TB, C, TS)  feature tile, native dtype
        # m_ref:   (TB, 1, TS)  mask tile, native dtype (broadcast over C in-kernel)
        # w_ref:   (C, K) f32   attention projection
        # tok_ref: (K, D) f32   style-token bank
        # out_ref: (TB, 1, D)   style vectors for this batch tile
        # num_acc: (TB, C) f32  running masked sum   (VMEM scratch)
        # den_acc: (TB, 1) f32  running mask count   (VMEM scratch)
        s = pl.program_id(1)

        @pl.when(s == 0)
        def _init():
            num_acc[...] = jnp.zeros_like(num_acc)
            den_acc[...] = jnp.zeros_like(den_acc)

        x = x_ref[...].astype(jnp.float32)            # (TB, C, TS)
        m = m_ref[...].astype(jnp.float32)            # (TB, 1, TS)
        if ragged:
            # The overhanging region of the final S block is undefined (may contain
            # NaN/Inf), so select against an iota validity mask; do NOT rely on
            # multiply-by-zero.
            lane = jax.lax.broadcasted_iota(jnp.int32, (1, 1, TS), 2)
            valid = (s * TS + lane) < S
            x = jnp.where(valid, x, 0.0)
            m = jnp.where(valid, m, 0.0)

        # jnp.sum(axis=-1) lowers to per-vreg VALU accumulation plus a single
        # cross-lane (XLU) reduce per sublane group per step, which stays inside the
        # DMA shadow -- no manual accumulate-then-reduce restructure needed.
        num_acc[...] += jnp.sum(x * m, axis=-1)       # (TB, C)
        den_acc[...] += jnp.sum(m, axis=-1)           # (TB, 1)

        @pl.when(s == pl.num_programs(1) - 1)
        def _finalize():
            # Runs once per batch tile -> exact divides are free (no approx recip).
            pooled = num_acc[...] / (den_acc[...] + jnp.float32(1e-8))        # (TB, C)
            logits = jnp.dot(pooled, w_ref[...],
                             preferred_element_type=jnp.float32)              # (TB, K)
            lmax = jnp.max(logits, axis=-1, keepdims=True)
            e = jnp.exp(logits - lmax)
            alpha = e / jnp.sum(e, axis=-1, keepdims=True)
            style = jnp.dot(alpha, tok_ref[...],
                            preferred_element_type=jnp.float32)               # (TB, D)
            out_ref[...] = style[:, None, :].astype(out_ref.dtype)

    return kernel


@partial(jax.jit, static_argnames=("s_tile_override",))
def feature_forward(x, m, w_attn, style_tokens, s_tile_override=None):
    """x: (B, C, H, W), m: (B, 1, H, W). Returns style vector (B, style_token_dim)."""
    B, C, H, W = x.shape
    S = H * W
    K, D = style_tokens.shape

    # Stream x and m in their native dtypes with NO padding and NO wrapper cast of the
    # big tensors (reshape is a contiguous metadata op) -> no extra HBM copy.
    x_flat = x.reshape(B, C, S)
    m_flat = m.reshape(B, 1, S)

    x_item = jnp.dtype(x.dtype).itemsize
    m_item = jnp.dtype(m.dtype).itemsize
    sub_x = max(8, 32 // x_item)   # sublane group size for the x tile's dtype
    sub_m = max(8, 32 // m_item)   # mask tile has sublane extent 1 -> padded to this

    TB = _pick_tb(B)

    # Per-generation VMEM strategy.
    vmem_cap = _vmem_capacity_bytes()
    if vmem_cap <= 64 * 2**20:            # v7x-class: 64 MiB physical VMEM per TC
        usable = vmem_cap - 8 * 2**20     # headroom for Mosaic internal scratch
        stream_budget = 28 * 2**20        # double-buffered x + m tiles (~14 MiB x block)
    else:                                 # v5e / v6e: 128 MiB physical VMEM
        usable = min(vmem_cap - 32 * 2**20, 96 * 2**20)
        stream_budget = 32 * 2**20        # ~16 MiB x block
    usable = max(usable, 24 * 2**20)

    # VMEM bytes per lane-column of TS for the double-buffered x and mask tiles
    # (includes the mask's sublane-1 -> sub_m padding, which is ~8x its raw bytes).
    per_ts = 2 * (TB * _round_up(C, sub_x) * x_item + TB * sub_m * m_item)
    ts_cap = max(128, _round_down(stream_budget // per_ts, 128))

    if s_tile_override is not None and s_tile_override < S:
        TS = int(s_tile_override)         # test hook: must be a multiple of 128
        ragged = (S % TS) != 0
    elif S <= ts_cap:
        TS, ragged = S, False             # full-S block (full-dim exemption, no tail)
    else:
        TS, ragged = ts_cap, (S % ts_cap) != 0
    n_s = (S + TS - 1) // TS
    grid = (B // TB, n_s)

    w_p = w_attn.astype(jnp.float32)
    tok = style_tokens.astype(jnp.float32)

    # VMEM accounting (with sublane/lane padding of every tile), double-buffered.
    x_blk = TB * _round_up(C, sub_x) * _round_up(TS, 128) * x_item
    m_blk = TB * sub_m * _round_up(TS, 128) * m_item
    o_blk = TB * 8 * _round_up(D, 128) * 4
    w_blk = _round_up(C, 8) * _round_up(K, 128) * 4
    t_blk = _round_up(K, 8) * _round_up(D, 128) * 4
    scr = _round_up(TB, 8) * _round_up(C, 128) * 4 + _round_up(TB, 8) * 128 * 4
    needed = 2 * (x_blk + m_blk + o_blk + w_blk + t_blk) + scr
    vmem_limit = int(min(usable, max(needed + 4 * 2**20, 16 * 2**20)))

    out = pl.pallas_call(
        _make_kernel(S, TS, ragged),
        out_shape=jax.ShapeDtypeStruct((B, 1, D), jnp.float32),
        grid_spec=pltpu.PrefetchScalarGridSpec(
            num_scalar_prefetch=0,
            grid=grid,
            in_specs=[
                pl.BlockSpec((TB, C, TS), lambda b, s: (b, 0, s)),
                pl.BlockSpec((TB, 1, TS), lambda b, s: (b, 0, s)),
                pl.BlockSpec((C, K), lambda b, s: (0, 0)),
                pl.BlockSpec((K, D), lambda b, s: (0, 0)),
            ],
            out_specs=pl.BlockSpec((TB, 1, D), lambda b, s: (b, 0, 0)),
            scratch_shapes=[
                pltpu.VMEM((TB, C), jnp.float32),   # masked-sum accumulator
                pltpu.VMEM((TB, 1), jnp.float32),   # mask-count accumulator
            ],
        ),
        compiler_params=pltpu.CompilerParams(
            dimension_semantics=("parallel", "arbitrary"),
            vmem_limit_bytes=vmem_limit),
    )(x_flat, m_flat, w_p, tok)
    return out[:, 0, :]


def feature_forward_ref(x, m, w_attn, style_tokens):
    """Pure-JAX reference for correctness checking."""
    B, C, H, W = x.shape
    S = H * W
    x_flat = x.reshape(B, C, S).astype(jnp.float32)
    m_flat = m.reshape(B, 1, S).astype(jnp.float32)
    pooled = jnp.sum(x_flat * m_flat, axis=-1) / (
        jnp.sum(m_flat, axis=(-1, -2)) + 1e-8)[:, None]
    logits = pooled @ w_attn.astype(jnp.float32)
    alpha = jax.nn.softmax(logits, axis=-1)
    return alpha @ style_tokens.astype(jnp.float32)


if __name__ == "__main__":
    # Small, deterministic example consistent with the module's NCHW conv conventions.
    B, C, H, W = 2, 4, 16, 16
    ALPHA_DIM = 8          # self.alpha_dim
    STYLE_TOKEN_DIM = 32   # self.style_token_dim

    key = jax.random.PRNGKey(0)
    kx, km, kw, kt = jax.random.split(key, 4)

    x = jax.random.normal(kx, (B, C, H, W), dtype=jnp.float32)
    # Binary mask m (e.g. a sampling / ROI mask), (B, 1, H, W), streamed as bf16.
    m = (jax.random.uniform(km, (B, 1, H, W)) > 0.5).astype(jnp.bfloat16)

    # Deterministic synthetic parameters (shapes implied by alpha_dim / style_token_dim).
    w_attn = jax.random.normal(kw, (C, ALPHA_DIM), dtype=jnp.float32) * 0.1
    style_tokens = jax.random.normal(kt, (ALPHA_DIM, STYLE_TOKEN_DIM), dtype=jnp.float32)

    out = feature_forward(x, m, w_attn, style_tokens)
    jax.block_until_ready(out)
    ref = feature_forward_ref(x, m, w_attn, style_tokens)
    assert out.shape == (B, STYLE_TOKEN_DIM), out.shape
    assert jnp.allclose(out, ref, atol=1e-4, rtol=1e-4), (out, ref)

    # Second check: multi-step S reduction with a ragged final tile (S = 324, TS = 128
    # -> 3 steps, tail of 68 valid lanes masked in-kernel).
    H2 = W2 = 18
    kx2, km2 = jax.random.split(jax.random.PRNGKey(1))
    x2 = jax.random.normal(kx2, (B, C, H2, W2), dtype=jnp.float32)
    m2 = (jax.random.uniform(km2, (B, 1, H2, W2)) > 0.5).astype(jnp.bfloat16)
    out2 = feature_forward(x2, m2, w_attn, style_tokens, s_tile_override=128)
    jax.block_until_ready(out2)
    ref2 = feature_forward_ref(x2, m2, w_attn, style_tokens)
    assert out2.shape == (B, STYLE_TOKEN_DIM), out2.shape
    assert jnp.allclose(out2, ref2, atol=1e-4, rtol=1e-4), (out2, ref2)

    print("KERNEL_OK")
</pallas_src>

<mosaic_0001>
module attributes {stable_mosaic.version = 11 : i64} {
  func.func @kernel(%arg0: i32, %arg1: i32, %arg2: memref<1x4x256xf32, #tpu.memory_space<vmem>>, %arg3: memref<1x1x256xbf16, #tpu.memory_space<vmem>>, %arg4: memref<4x8xf32, #tpu.memory_space<vmem>>, %arg5: memref<8x32xf32, #tpu.memory_space<vmem>>, %arg6: memref<1x1x32xf32, #tpu.memory_space<vmem>>, %arg7: memref<1x4xf32, #tpu.memory_space<vmem>>, %arg8: memref<1x1xf32, #tpu.memory_space<vmem>>) attributes {dimension_semantics = [#tpu.dimension_semantics<parallel>, #tpu.dimension_semantics<arbitrary>], iteration_bounds = array<i64: 2, 1>, scalar_prefetch = 0 : i64, scratch_operands = 2 : i64, tpu.core_type = #tpu.core_type<tc>, window_params = [{transform_indices = @transform_0, window_bounds = array<i64: 1, 4, 256>}, {transform_indices = @transform_1, window_bounds = array<i64: 1, 1, 256>}, {pipeline_mode = #tpu.pipeline_mode<synchronous>, transform_indices = @transform_2, window_bounds = array<i64: 4, 8>}, {pipeline_mode = #tpu.pipeline_mode<synchronous>, transform_indices = @transform_3, window_bounds = array<i64: 8, 32>}, {transform_indices = @transform_4, window_bounds = array<i64: 1, 1, 32>}]} {
    %c0_i32 = arith.constant 0 : i32
    %0 = arith.cmpi eq, %arg1, %c0_i32 : i32
    %1 = arith.extui %0 : i1 to i32
    %c0_i32_0 = arith.constant 0 : i32
    %2 = arith.cmpi ne, %1, %c0_i32_0 : i32
    scf.if %2 {
      %cst_17 = arith.constant 0.000000e+00 : f32
      %19 = vector.broadcast %cst_17 : f32 to vector<1x4xf32>
      %c0_18 = arith.constant 0 : index
      %c0_19 = arith.constant 0 : index
      %20 = vector.load %arg7[%c0_18, %c0_19] : memref<1x4xf32, #tpu.memory_space<vmem>>, vector<1x4xf32>
      tpu.vector_store %arg7[%c0_18, %c0_19], %19 {strides = array<i32>} : memref<1x4xf32, #tpu.memory_space<vmem>>, vector<1x4xf32>,
      %cst_20 = arith.constant 0.000000e+00 : f32
      %21 = vector.broadcast %cst_20 : f32 to vector<1x1xf32>
      %c0_21 = arith.constant 0 : index
      %c0_22 = arith.constant 0 : index
      %22 = vector.load %arg8[%c0_21, %c0_22] : memref<1x1xf32, #tpu.memory_space<vmem>>, vector<1x1xf32>
      tpu.vector_store %arg8[%c0_21, %c0_22], %21 {strides = array<i32>} : memref<1x1xf32, #tpu.memory_space<vmem>>, vector<1x1xf32>,
    } else {
    }
    %c0 = arith.constant 0 : index
    %c0_1 = arith.constant 0 : index
    %c0_2 = arith.constant 0 : index
    %3 = vector.load %arg2[%c0, %c0_1, %c0_2] : memref<1x4x256xf32, #tpu.memory_space<vmem>>, vector<1x4x256xf32>
    %c0_3 = arith.constant 0 : index
    %c0_4 = arith.constant 0 : index
    %c0_5 = arith.constant 0 : index
    %4 = vector.load %arg3[%c0_3, %c0_4, %c0_5] : memref<1x1x256xbf16, #tpu.memory_space<vmem>>, vector<1x1x256xbf16>
    %5 = arith.extf %4 : vector<1x1x256xbf16> to vector<1x1x256xf32>
    %c0_6 = arith.constant 0 : index
    %c0_7 = arith.constant 0 : index
    %6 = vector.load %arg7[%c0_6, %c0_7] : memref<1x4xf32, #tpu.memory_space<vmem>>, vector<1x4xf32>
    %7 = vector.broadcast %5 : vector<1x1x256xf32> to vector<1x4x256xf32>
    %8 = arith.mulf %3, %7 : vector<1x4x256xf32>
    %cst = arith.constant dense<0.000000e+00> : vector<1x4xf32>
    %9 = vector.multi_reduction <add>, %8, %cst [2] : vector<1x4x256xf32> to vector<1x4xf32>
    %10 = arith.addf %6, %9 : vector<1x4xf32>
    %c0_8 = arith.constant 0 : index
    %c0_9 = arith.constant 0 : index
    %11 = vector.load %arg7[%c0_8, %c0_9] : memref<1x4xf32, #tpu.memory_space<vmem>>, vector<1x4xf32>
    tpu.vector_store %arg7[%c0_8, %c0_9], %10 {strides = array<i32>} : memref<1x4xf32, #tpu.memory_space<vmem>>, vector<1x4xf32>,
    %c0_10 = arith.constant 0 : index
    %c0_11 = arith.constant 0 : index
    %12 = vector.load %arg8[%c0_10, %c0_11] : memref<1x1xf32, #tpu.memory_space<vmem>>, vector<1x1xf32>
    %cst_12 = arith.constant dense<0.000000e+00> : vector<1x1xf32>
    %13 = vector.multi_reduction <add>, %5, %cst_12 [2] : vector<1x1x256xf32> to vector<1x1xf32>
    %14 = arith.addf %12, %13 : vector<1x1xf32>
    %c0_13 = arith.constant 0 : index
    %c0_14 = arith.constant 0 : index
    %15 = vector.load %arg8[%c0_13, %c0_14] : memref<1x1xf32, #tpu.memory_space<vmem>>, vector<1x1xf32>
    tpu.vector_store %arg8[%c0_13, %c0_14], %14 {strides = array<i32>} : memref<1x1xf32, #tpu.memory_space<vmem>>, vector<1x1xf32>,
    %c0_i32_15 = arith.constant 0 : i32
    %16 = arith.cmpi eq, %arg1, %c0_i32_15 : i32
    %17 = arith.extui %16 : i1 to i32
    %c0_i32_16 = arith.constant 0 : i32
    %18 = arith.cmpi ne, %17, %c0_i32_16 : i32
    scf.if %18 {
      %c0_17 = arith.constant 0 : index
      %c0_18 = arith.constant 0 : index
      %19 = vector.load %arg7[%c0_17, %c0_18] : memref<1x4xf32, #tpu.memory_space<vmem>>, vector<1x4xf32>
      %c0_19 = arith.constant 0 : index
      %c0_20 = arith.constant 0 : index
      %20 = vector.load %arg8[%c0_19, %c0_20] : memref<1x1xf32, #tpu.memory_space<vmem>>, vector<1x1xf32>
      %cst_21 = arith.constant 9.99999993E-9 : f32
      %21 = vector.broadcast %cst_21 : f32 to vector<1x1xf32>
      %22 = arith.addf %20, %21 : vector<1x1xf32>
      %23 = vector.broadcast %22 : vector<1x1xf32> to vector<1x4xf32>
      %24 = arith.divf %19, %23 : vector<1x4xf32>
      %c0_22 = arith.constant 0 : index
      %c0_23 = arith.constant 0 : index
      %25 = vector.load %arg4[%c0_22, %c0_23] : memref<4x8xf32, #tpu.memory_space<vmem>>, vector<4x8xf32>
      %cst_24 = arith.constant dense<0.000000e+00> : vector<1x8xf32>
      %26 = tpu.matmul %24, %25, %cst_24 {dimension_numbers = #tpu.dot_dimension_numbers<[1], [0], [0], [1], [0, 0, 1, 1], [], []>} : vector<1x4xf32>, vector<4x8xf32>, vector<1x8xf32> -> vector<1x8xf32>
      %cst_25 = arith.constant dense<0xFF800000> : vector<1xf32>
      %27 = vector.multi_reduction <maximumf>, %26, %cst_25 [1] : vector<1x8xf32> to vector<1xf32>
      %28 = vector.shape_cast %27 : vector<1xf32> to vector<1x1xf32>
      %29 = vector.broadcast %28 : vector<1x1xf32> to vector<1x8xf32>
      %30 = arith.subf %26, %29 : vector<1x8xf32>
      %31 = math.exp %30 : vector<1x8xf32>
      %cst_26 = arith.constant dense<0.000000e+00> : vector<1xf32>
      %32 = vector.multi_reduction <add>, %31, %cst_26 [1] : vector<1x8xf32> to vector<1xf32>
      %33 = vector.shape_cast %32 : vector<1xf32> to vector<1x1xf32>
      %34 = vector.broadcast %33 : vector<1x1xf32> to vector<1x8xf32>
      %35 = arith.divf %31, %34 : vector<1x8xf32>
      %c0_27 = arith.constant 0 : index
      %c0_28 = arith.constant 0 : index
      %36 = vector.load %arg5[%c0_27, %c0_28] : memref<8x32xf32, #tpu.memory_space<vmem>>, vector<8x32xf32>
      %cst_29 = arith.constant dense<0.000000e+00> : vector<1x32xf32>
      %37 = tpu.matmul %35, %36, %cst_29 {dimension_numbers = #tpu.dot_dimension_numbers<[1], [0], [0], [1], [0, 0, 1, 1], [], []>} : vector<1x8xf32>, vector<8x32xf32>, vector<1x32xf32> -> vector<1x32xf32>
      %38 = vector.shape_cast %37 : vector<1x32xf32> to vector<1x1x32xf32>
      %c0_30 = arith.constant 0 : index
      %c0_31 = arith.constant 0 : index
      %c0_32 = arith.constant 0 : index
      %39 = vector.load %arg6[%c0_30, %c0_31, %c0_32] : memref<1x1x32xf32, #tpu.memory_space<vmem>>, vector<1x1x32xf32>
      tpu.vector_store %arg6[%c0_30, %c0_31, %c0_32], %38 {strides = array<i32>} : memref<1x1x32xf32, #tpu.memory_space<vmem>>, vector<1x1x32xf32>,
    } else {
    }
    return
  }
  func.func @transform_0(%arg0: i32, %arg1: i32) -> (i32, i32, i32) {
    %c0_i32 = arith.constant 0 : i32
    %c0_i32_0 = arith.constant 0 : i32
    return %arg0, %c0_i32, %arg1 : i32, i32, i32
  }
  func.func @transform_1(%arg0: i32, %arg1: i32) -> (i32, i32, i32) {
    %c0_i32 = arith.constant 0 : i32
    %c0_i32_0 = arith.constant 0 : i32
    return %arg0, %c0_i32, %arg1 : i32, i32, i32
  }
  func.func @transform_2(%arg0: i32, %arg1: i32) -> (i32, i32) {
    %c0_i32 = arith.constant 0 : i32
    %c0_i32_0 = arith.constant 0 : i32
    %c0_i32_1 = arith.constant 0 : i32
    return %c0_i32, %c0_i32_0 : i32, i32
  }
  func.func @transform_3(%arg0: i32, %arg1: i32) -> (i32, i32) {
    %c0_i32 = arith.constant 0 : i32
    %c0_i32_0 = arith.constant 0 : i32
    %c0_i32_1 = arith.constant 0 : i32
    return %c0_i32, %c0_i32_0 : i32, i32
  }
  func.func @transform_4(%arg0: i32, %arg1: i32) -> (i32, i32, i32) {
    %c0_i32 = arith.constant 0 : i32
    %c0_i32_0 = arith.constant 0 : i32
    %c0_i32_1 = arith.constant 0 : i32
    return %arg0, %c0_i32, %c0_i32_0 : i32, i32, i32
  }
}

</mosaic_0001>

<llo_original>
// kernel: feature_forward.1
$region0: #{feature_forward.1}
  #allocation0 [shape = 'u32[]', space=smem, size = 0x4, offset = 0x4, fixed_abs, tag = 'smem constant byte address 0x4 - core index']
  #allocation1 [shape = 'u32[72,128]{1,0:T(1,128)}', space=vmem, size = 0x9000, scoped, tag = 'internal scratch']
  #allocation2 [shape = 'f32[1,4]{1,0:T(1,128)}', space=vmem, size = 0x200, scoped, tag = 'scratch operand']
  #allocation3 [shape = 'f32[1,1]{1,0:T(1,128)}', space=vmem, size = 0x200, scoped, tag = 'scratch operand']
  %s0 = inlined_call_operand.vmem [shape: f32[2,4,256], index: 0, kind: input, shape index: {}]
  %s1 = inlined_call_operand.vmem [shape: bf16[2,1,256], index: 1, kind: input, shape index: {}]
  %s2 = inlined_call_operand.vmem [shape: f32[4,8], index: 2, kind: input, shape index: {}]
  %s3 = inlined_call_operand.vmem [shape: f32[8,32], index: 3, kind: input, shape index: {}]
  %s4 = inlined_call_operand.hbm [shape: f32[2,1,32], index: 4, kind: output, shape index: {}]
  %s5 = sld [smem:[#allocation0]]
  $region57: #{feature_forward.1} parent=0
    _
  %s7 = ssub.s32 1, %s5
  %s8 = scalar_select 0, %s7, %s5
  $region1: #{feature_forward.1} parent=0
    #allocation4 [shape = 'u8[1024]{0}', space=vmem, size = 0x400, scoped, tag = 'output window, operand 0']
    #allocation5 [shape = 's32[2]{0}', space=sflag, size = 0x8, scoped, tag = 'scoped memory for feature_forward.1']
    %9 = vsyncpa [#allocation5], 0
    %s10 = scalar_lea.sflag [#allocation5], 1
    %11 = vsyncpa %s10, 0
    loop: start=0, step=1, limit=4
    $region2: #{feature_forward.1} parent=1 // loop_pre_header
      _
    $region3: #{feature_forward.1} parent=1 // loop_header
      %s13 = sphi 0, %s17
      %p14 = scmp.ge.s32.totalorder %s13, 4
      %s20 = sphi 0, %s32
      %s21 = sphi 0, %s28
      %s22 = sphi 0, %s20
      %s23 = sphi 0, %s21
      %s24 = sphi 0, %s22
      %s25 = sphi 0, %s23
      %s37 = sphi 0, %s39
      %s40 = sphi 0, %s37
      %s41 = sphi 0, %s40
      %s57 = sphi 0, %s41
      %s65 = sphi 0, %s67
      %s68 = sphi 0, %s65
      %s69 = sphi 0, %s68
      %s85 = sphi 0, %s69
      %s89 = sphi 0, %s89
      %s91 = sphi 0, %s89
      %s92 = sphi 0, %s91
      %s106 = sphi 0, %s92
      %s110 = sphi 0, %s110
      %s112 = sphi 0, %s110
      %s113 = sphi 0, %s112
      %s127 = sphi 0, %s113
      %s133 = sphi 0, %s135
      %s136 = sphi 0, %s133
      %s137 = sphi 0, %s136
      %s153 = sphi 0, %s137
    $region4: #{feature_forward.1} parent=1 // loop_header_branch
      %16 = sbr.rel (%p14) target = $region8
    $region5: #{feature_forward.1} parent=1 // loop_body
      %s18 = ssub.s32 %s13, 1
      %s19 = ssub.s32 %s13, 2
      %s26 = sadd.s32 1, %s21
      %p27 = scmp.ge.s32.totalorder %s26, 1
      %s28 = scalar_select %p27, 0, %s26
      %s29 = sadd.s32 1, %s20
      %s30 = scalar_select %p27, %s29, %s20
      %p31 = scmp.ge.s32.totalorder %s30, 2
      %s32 = scalar_select %p31, 0, %s30
      %s33 = ssub.s32 %s20, %s32
      %s34 = ssub.s32 %s21, %s28
      %s35 = sor.u32 %s33, %s34
      %p36 = scmp.eq.s32.totalorder %s35, 0
      %s38 = sadd.s32 %s37, 1
      %s39 = scalar_select %p36, %s37, %s38
      %p42 = pneg %p36
      %p43 = scmp.eq.s32.totalorder %s13, 1
      %p44 = por %p42, %p43
      %p45 = scmp.ne.s32.totalorder %s37, %s40
      %p46 = scmp.eq.s32.totalorder %s13, 0
      %p47 = por %p45, %p46
      %p48 = scmp.ne.s32.totalorder %s37, %s40
      %p49 = scmp.eq.s32.totalorder %s18, 1
      %p50 = por %p48, %p49
      %p51 = scmp.ne.s32.totalorder %s40, %s41
      %p52 = scmp.eq.s32.totalorder %s18, 0
      %p53 = por %p51, %p52
      %p54 = scmp.ne.s32.totalorder %s40, %s41
      %p55 = scmp.eq.s32.totalorder %s19, 1
      %p56 = por %p54, %p55
      %p58 = scmp.ne.s32.totalorder %s41, %s57
      %p59 = scmp.eq.s32.totalorder %s19, 0
      %p60 = por %p58, %p59
      %s61 = ssub.s32 %s20, %s32
      %s62 = ssub.s32 %s21, %s28
      %s63 = sor.u32 %s61, %s62
      %p64 = scmp.eq.s32.totalorder %s63, 0
      %s66 = sadd.s32 %s65, 1
      %s67 = scalar_select %p64, %s65, %s66
      %p70 = pneg %p64
      %p71 = scmp.eq.s32.totalorder %s13, 1
      %p72 = por %p70, %p71
      %p73 = scmp.ne.s32.totalorder %s65, %s68
      %p74 = scmp.eq.s32.totalorder %s13, 0
      %p75 = por %p73, %p74
      %p76 = scmp.ne.s32.totalorder %s65, %s68
      %p77 = scmp.eq.s32.totalorder %s18, 1
      %p78 = por %p76, %p77
      %p79 = scmp.ne.s32.totalorder %s68, %s69
      %p80 = scmp.eq.s32.totalorder %s18, 0
      %p81 = por %p79, %p80
      %p82 = scmp.ne.s32.totalorder %s68, %s69
      %p83 = scmp.eq.s32.totalorder %s19, 1
      %p84 = por %p82, %p83
      %p86 = scmp.ne.s32.totalorder %s69, %s85
      %p87 = scmp.eq.s32.totalorder %s19, 0
      %p88 = por %p86, %p87
      %s90 = sadd.s32 %s89, 1
      %p93 = scmp.eq.s32.totalorder %s13, 1
      %p94 = scmp.ne.s32.totalorder %s89, %s91
      %p95 = scmp.eq.s32.totalorder %s13, 0
      %p96 = por %p94, %p95
      %p97 = scmp.ne.s32.totalorder %s89, %s91
      %p98 = scmp.eq.s32.totalorder %s18, 1
      %p99 = por %p97, %p98
      %p100 = scmp.ne.s32.totalorder %s91, %s92
      %p101 = scmp.eq.s32.totalorder %s18, 0
      %p102 = por %p100, %p101
      %p103 = scmp.ne.s32.totalorder %s91, %s92
      %p104 = scmp.eq.s32.totalorder %s19, 1
      %p105 = por %p103, %p104
      %p107 = scmp.ne.s32.totalorder %s92, %s106
      %p108 = scmp.eq.s32.totalorder %s19, 0
      %p109 = por %p107, %p108
      %s111 = sadd.s32 %s110, 1
      %p114 = scmp.eq.s32.totalorder %s13, 1
      %p115 = scmp.ne.s32.totalorder %s110, %s112
      %p116 = scmp.eq.s32.totalorder %s13, 0
      %p117 = por %p115, %p116
      %p118 = scmp.ne.s32.totalorder %s110, %s112
      %p119 = scmp.eq.s32.totalorder %s18, 1
      %p120 = por %p118, %p119
      %p121 = scmp.ne.s32.totalorder %s112, %s113
      %p122 = scmp.eq.s32.totalorder %s18, 0
      %p123 = por %p121, %p122
      %p124 = scmp.ne.s32.totalorder %s112, %s113
      %p125 = scmp.eq.s32.totalorder %s19, 1
      %p126 = por %p124, %p125
      %p128 = scmp.ne.s32.totalorder %s113, %s127
      %p129 = scmp.eq.s32.totalorder %s19, 0
      %p130 = por %p128, %p129
      %s131 = ssub.s32 %s20, %s32
      %p132 = scmp.eq.s32.totalorder %s131, 0
      %s134 = sadd.s32 %s133, 1
      %s135 = scalar_select %p132, %s133, %s134
      %p138 = pneg %p132
      %p139 = scmp.eq.s32.totalorder %s13, 1
      %p140 = por %p138, %p139
      %p141 = scmp.ne.s32.totalorder %s133, %s136
      %p142 = scmp.eq.s32.totalorder %s13, 0
      %p143 = por %p141, %p142
      %p144 = scmp.ne.s32.totalorder %s133, %s136
      %p145 = scmp.eq.s32.totalorder %s18, 1
      %p146 = por %p144, %p145
      %p147 = scmp.ne.s32.totalorder %s136, %s137
      %p148 = scmp.eq.s32.totalorder %s18, 0
      %p149 = por %p147, %p148
      %p150 = scmp.ne.s32.totalorder %s136, %s137
      %p151 = scmp.eq.s32.totalorder %s19, 1
      %p152 = por %p150, %p151
      %p154 = scmp.ne.s32.totalorder %s137, %s153
      %p155 = scmp.eq.s32.totalorder %s19, 0
      %p156 = por %p154, %p155
      %p157 = scmp.le.s32.totalorder 1, %s13
      %p158 = scmp.lt.s32.totalorder %s13, 3
      %p159 = pnand %p157, %p158
      %p160 = pneg %p159
      // Predicated region
      $region9: #{feature_forward.1} parent=5 // pred_check
        _
      $region10: #{feature_forward.1} parent=5 // pred_check_branch
        %162 = sbr.rel (%p159) target = $region12
      $region11: #{feature_forward.1} parent=5 // pred_region
        %s163 = ssub.s32 %s13, 1
        // Predicated region
        $region13: #{feature_forward.1} parent=11 // pred_check
          %p164 = pneg %p102
        $region14: #{feature_forward.1} parent=11 // pred_check_branch
          %166 = sbr.rel (%p164) target = $region16
        $region15: #{feature_forward.1} parent=11 // pred_region
          _
        $region16: #{feature_forward.1} parent=11 // pred_fallthru
          _
        // Predicated region
        $region17: #{feature_forward.1} parent=11 // pred_check
          %p167 = pneg %p123
        $region18: #{feature_forward.1} parent=11 // pred_check_branch
          %169 = sbr.rel (%p167) target = $region20
        $region19: #{feature_forward.1} parent=11 // pred_region
          _
        $region20: #{feature_forward.1} parent=11 // pred_fallthru
          _
      $region12: #{feature_forward.1} parent=5 // pred_fallthru
        _
      %p170 = scmp.lt.s32.totalorder %s13, 2
      // Predicated region
      $region21: #{feature_forward.1} parent=5 // pred_check
        %p171 = pneg %p170
      $region22: #{feature_forward.1} parent=5 // pred_check_branch
        %173 = sbr.rel (%p171) target = $region24
      $region23: #{feature_forward.1} parent=5 // pred_region
        // Predicated region
        $region25: #{feature_forward.1} parent=23 // pred_check
          %p174 = pneg %p47
        $region26: #{feature_forward.1} parent=23 // pred_check_branch
          %176 = sbr.rel (%p174) target = $region28
        $region27: #{feature_forward.1} parent=23 // pred_region
          %s177 = smul.u32 2, %s21
          %p178 = scmp.lt.s32.totalorder %s20, 1
          %s179 = scalar_select %p178, %s20, 1
          %p180 = scmp.lt.s32.totalorder %s177, 1
          %s181 = scalar_select %p180, %s177, 1
          %s182 = smul.addr %s179, 2
          %s183 = sadd.s32 %s181, %s182
          %s184 = smul.addr %s183, 4
          %s185 = scalar_lea.vmem %s0, %s184
          %s186 = smul.u32 2, %s21
        $region28: #{feature_forward.1} parent=23 // pred_fallthru
          _
        // Predicated region
        $region29: #{feature_forward.1} parent=23 // pred_check
          %p187 = pneg %p75
        $region30: #{feature_forward.1} parent=23 // pred_check_branch
          %189 = sbr.rel (%p187) target = $region32
        $region31: #{feature_forward.1} parent=23 // pred_region
          %s190 = smul.u32 2, %s21
          %p191 = scmp.lt.s32.totalorder %s20, 1
          %s192 = scalar_select %p191, %s20, 1
          %p193 = scmp.lt.s32.totalorder %s190, 1
          %s194 = scalar_select %p193, %s190, 1
          %s195 = smul.addr %s192, 2
          %s196 = sadd.s32 %s194, %s195
          %s197 = scalar_lea.vmem %s1, %s196
          %s198 = smul.u32 2, %s21
        $region32: #{feature_forward.1} parent=23 // pred_fallthru
          _
      $region24: #{feature_forward.1} parent=5 // pred_fallthru
        _
      %p199 = scmp.le.s32.totalorder 1, %s13
      %p200 = scmp.lt.s32.totalorder %s13, 3
      %p201 = pnand %p199, %p200
      %p202 = pneg %p201
      // Predicated region
      $region33: #{feature_forward.1} parent=5 // pred_check
        _
      $region34: #{feature_forward.1} parent=5 // pred_check_branch
        %204 = sbr.rel (%p201) target = $region36
      $region35: #{feature_forward.1} parent=5 // pred_region
        %s205 = ssub.s32 %s13, 1
        %s206 = smul.u32 2, %s23
        %p207 = scmp.lt.s32.totalorder %s22, 1
        %s208 = scalar_select %p207, %s22, 1
        %p209 = scmp.lt.s32.totalorder %s206, 1
        %s210 = scalar_select %p209, %s206, 1
        %s211 = smul.addr %s208, 2
        %s212 = sadd.s32 %s210, %s211
        %s213 = smul.addr %s212, 4
        %s214 = scalar_lea.vmem %s0, %s213
        %p215 = pneg %p53
        %p216 = pneg %p50
        %s217 = smul.u32 2, %s23
        %p218 = scmp.lt.s32.totalorder %s22, 1
        %s219 = scalar_select %p218, %s22, 1
        %p220 = scmp.lt.s32.totalorder %s217, 1
        %s221 = scalar_select %p220, %s217, 1
        %s222 = smul.addr %s219, 2
        %s223 = sadd.s32 %s221, %s222
        %s224 = scalar_lea.vmem %s1, %s223
        %p225 = pneg %p81
        %p226 = pneg %p78
        %p227 = pneg %p102
        %p228 = pneg %p99
        %p229 = pneg %p123
        %p230 = pneg %p120
        %p231 = pneg %p149
        %p232 = pneg %p146
        %s233 = sand.u32 %s136, 1
        %s234 = scalar_lea.sflag [#allocation5], %s233
        %s235 = sand.u32 %s136, 1
        %s236 = scalar_lea.vmem [#allocation4], %s235
        %s237 = smul.u32 2, %s23
        %p238 = scmp.lt.s32.totalorder %s22, 1
        %s239 = scalar_select %p238, %s22, 1
        %p240 = scmp.lt.s32.totalorder %s237, 1
        %s241 = scalar_select %p240, %s237, 1
        %s242 = smul.addr %s239, 2
        %s243 = sadd.s32 %s241, %s242
        %s244 = smul.addr %s243, 4
        %s245 = scalar_lea.vmem %s0, %s244
        %s246 = smul.u32 2, %s23
        %s247 = smul.u32 2, %s23
        %p248 = scmp.lt.s32.totalorder %s22, 1
        %s249 = scalar_select %p248, %s22, 1
        %p250 = scmp.lt.s32.totalorder %s247, 1
        %s251 = scalar_select %p250, %s247, 1
        %s252 = smul.addr %s249, 2
        %s253 = sadd.s32 %s251, %s252
        %s254 = scalar_lea.vmem %s1, %s253
        %s255 = smul.u32 2, %s23
        %p256 = scmp.eq.s32.totalorder %s23, 0
        // Predicated region
        $region37: #{feature_forward.1} parent=35 // pred_check
          %p257 = pneg %p256
        $region38: #{feature_forward.1} parent=35 // pred_check_branch
          %259 = sbr.rel (%p257) target = $region40
        $region39: #{feature_forward.1} parent=35 // pred_region
          %vm260 = vcmask 24576
          %261 = vst.msk [vmem:[#allocation2] sm:$0x1] %vm260, 0.0
          %vm262 = vcmask 0
          %263 = vst.msk [vmem:[#allocation3] sm:$0x1] %vm262, 0.0
        $region40: #{feature_forward.1} parent=35 // pred_fallthru
          _
        %v264 = vld [vmem:[%s245] sm:$0xff]
        %v265 = vld [vmem:[%s254] sm:$0x3]
        %v266 = vunpack.c.l.bf16 %v265
        %v267 = vld [vmem:[#allocation2] sm:$0x1]
        %v269 = vperm.slane %v266, 0
        %v270 = vperm.slane %v266, 2
        %v273 = vperm.slane %v269, 0
        %v274 = vperm.slane %v270, 0
        %v277 = vrot.slane %v274, 4
        %vm278 = vcmask 1043456
        %v279 = vsel %vm278, %v273, %v277
        %v281 = vmul.f32 %v264, %v279
        %283 = vst [vmem:[#allocation1] ss:$2 sm:$0xff] %v281
        %v284 = vld.sshfl [vmem:[#allocation1] sm:$0xff pattern:$0x75316420]
        %v285 = vld.sshfl [vmem:[#allocation1 + $0x8] sm:$0xff pattern:$0x75316420]
        %v288 = vsel %vm278, %v284, 0.0
        %v289 = vsel %vm278, %v285, 0.0
        %v290 = vadd.f32 %v288, %v289
        %291 = vadd.xlane.f32.xlu0 %v290
        %v292 = vpop.xlane.xlu0 %291
        %v294 = vperm.slane %v292, 0
        %v295 = vperm.slane %v292, 1
        %v296 = vperm.slane %v292, 2
        %v297 = vperm.slane %v292, 3
        %298 = vst [vmem:[#allocation1] ss:$9 sm:$0xff] %v294
        %s299 = scalar_lea.vmem [#allocation1], 1
        %300 = vst [vmem:[%s299] ss:$9 sm:$0xff] %v295
        %s301 = scalar_lea.vmem [#allocation1], 2
        %302 = vst [vmem:[%s301] ss:$9 sm:$0xff] %v296
        %s303 = scalar_lea.vmem [#allocation1], 3
        %304 = vst [vmem:[%s303] ss:$9 sm:$0xff] %v297
        %v305 = vld [vmem:[#allocation1] sm:$0xff]
        %306 = vset.pattern.permute.xlu0 0
        %307 = vperm.xlu0 %306, %v305
        %v308 = vpop.permute.xlu0 %307
        %v309 = vlaneseq
        %v310 = vand.u32 %v309, 127
        %v311 = vperm.slane %v308, %v310
        %v313 = vadd.f32 %v267, %v311
        %vm314 = vcmask 24576
        %315 = vst.msk [vmem:[#allocation2] sm:$0x1] %vm314, %v313
        %v316 = vld [vmem:[#allocation3] sm:$0x1]
        %vm317 = vcmask 1040384
        %v318 = vsel %vm317, %v269, 0.0
        %v319 = vsel %vm317, %v270, 0.0
        %v320 = vadd.f32 %v318, %v319
        %321 = vadd.xlane.f32.xlu0 %v320
        %v322 = vpop.xlane.xlu0 %321
        %v323 = vadd.f32 %v316, %v322
        %vm324 = vcmask 0
        %325 = vst.msk [vmem:[#allocation3] sm:$0x1] %vm324, %v323
        // Predicated region
        $region41: #{feature_forward.1} parent=35 // pred_check
          %p326 = pneg %p256
        $region42: #{feature_forward.1} parent=35 // pred_check_branch
          %328 = sbr.rel (%p326) target = $region44
        $region43: #{feature_forward.1} parent=35 // pred_region
          %v329 = vld [vmem:[#allocation2] sm:$0x1]
          %v330 = vld [vmem:[#allocation3] sm:$0x1]
          %v331 = vadd.f32 %v330, 1e-08
          %333 = vset.pattern.permute.xlu0 0
          %334 = vperm.xlu0 %333, %v331
          %v335 = vpop.permute.xlu0 %334
          %v337 = vperm.slane %v335, 0
          %v338 = vrcp.pop %v337
          %v339 = vmul.f32 %v337, %v338
          %v340 = vsub.f32 1.0, %v339
          %v341 = vmul.f32 %v338, %v340
          %v342 = vadd.f32 %v338, %v341
          %vm343 = vweird.f32 %v337
          %vm344 = vweird.f32 %v338
          %vm345 = vmor %vm343, %vm344
          %v346 = vsel %vm345, %v338, %v342
          %v347 = vand.u32 2147483647, %v337
          %vm348 = vcmp.eq.f32.partialorder %v347, 8.507059e+37
          %v349 = vand.u32 %v337, 2147483648
          %v350 = vor.u32 1.1754944e-38, %v349
          %v351 = vsel %vm348, %v350, %v346
          %v352 = vmul.f32 %v329, %v351
          %v353 = vld [vmem:[%s2] sm:$0xf]
          %vm354 = vcmask 31744
          %v356 = vsel %vm354, %v352, 0
          %v359 = vsel %vm278, %v353, 0
          %361 = vmatpush.msra.mxu0 0.0
          %362 = vmatpush.msra.mxu0 0.0
          %363 = vmatpush.msra.mxu0 0.0
          %364 = vmatpush.msra.mxu0 0.0
          %365 = vmatpush.msra.mxu0 0.0
          %366 = vmatpush.msra.mxu0 0.0
          %367 = vmatpush.msra.mxu0 0.0
          %368 = vmatpush.msra.mxu0 0.0
          %369 = vmatpush.msra.mxu0 0.0
          %370 = vmatpush.msra.mxu0 0.0
          %371 = vmatpush.msra.mxu0 0.0
          %372 = vmatpush.msra.mxu0 0.0
          %373 = vmatpush.msra.mxu0 0.0
          %374 = vmatpush.msra.mxu0 0.0
          %375 = vmatpush.msra.mxu0 0.0
          %376 = vmatpush.msra.mxu0 %v359
          %377 = vmatmul.f32.gmra.mxu0 %v356
          %v378 = vpop.f32.mrf.mxu0
          %v379 = vadd.f32 0.0, %v378
          %380 = vdwg.mxu0
          %vm381 = vcmask 57344
          %v382 = vsel %vm381, %v379, -inf
          %383 = vmax.xlane.f32.xlu0 %v382
          %v384 = vpop.xlane.xlu0 %383
          %v385 = vsub.f32 %v379, %v384
          %v386 = vmul.f32 %v385, 1.442695
          %v387 = vpow.pop %v386
          %v388 = vsel %vm381, %v387, 0.0
          %389 = vadd.xlane.f32.xlu0 %v388
          %v390 = vpop.xlane.xlu0 %389
          %v391 = vrcp.pop %v390
          %v392 = vmul.f32 %v390, %v391
          %v393 = vsub.f32 1.0, %v392
          %v394 = vmul.f32 %v391, %v393
          %v395 = vadd.f32 %v391, %v394
          %vm396 = vweird.f32 %v390
          %vm397 = vweird.f32 %v391
          %vm398 = vmor %vm396, %vm397
          %v399 = vsel %vm398, %v391, %v395
          %v400 = vand.u32 2147483647, %v390
          %vm401 = vcmp.eq.f32.partialorder %v400, 8.507059e+37
          %v402 = vand.u32 %v390, 2147483648
          %v403 = vor.u32 1.1754944e-38, %v402
          %v404 = vsel %vm401, %v403, %v399
          %v405 = vmul.f32 %v387, %v404
          %v406 = vld [vmem:[%s3] sm:$0xff]
          %vm407 = vcmask 64512
          %v409 = vsel %vm407, %v405, 0
          %411 = vmatpush.msra.mxu0 0.0
          %412 = vmatpush.msra.mxu0 0.0
          %413 = vmatpush.msra.mxu0 0.0
          %414 = vmatpush.msra.mxu0 0.0
          %415 = vmatpush.msra.mxu0 0.0
          %416 = vmatpush.msra.mxu0 0.0
          %417 = vmatpush.msra.mxu0 0.0
          %418 = vmatpush.msra.mxu0 0.0
          %419 = vmatpush.msra.mxu0 0.0
          %420 = vmatpush.msra.mxu0 0.0
          %421 = vmatpush.msra.mxu0 0.0
          %422 = vmatpush.msra.mxu0 0.0
          %423 = vmatpush.msra.mxu0 0.0
          %424 = vmatpush.msra.mxu0 0.0
          %425 = vmatpush.msra.mxu0 0.0
          %426 = vmatpush.msra.mxu0 %v406
          %427 = vmatmul.f32.gmra.mxu0 %v409
          %v428 = vpop.f32.mrf.mxu0
          %v429 = vadd.f32 0.0, %v428
          %430 = vdwg.mxu0
          %vm431 = vcmask 253952
          %432 = vst.msk [vmem:[%s236] sm:$0x1] %vm431, %v429
        $region44: #{feature_forward.1} parent=35 // pred_fallthru
          _
        %s433 = sand.u32 %s136, 1
        %s434 = scalar_lea.sflag [#allocation5], %s433
        %s435 = sand.u32 %s136, 1
        %s436 = scalar_lea.vmem [#allocation4], %s435
        // Predicated region
        $region45: #{feature_forward.1} parent=35 // pred_check
          %p437 = pneg %p146
        $region46: #{feature_forward.1} parent=35 // pred_check_branch
          %439 = sbr.rel (%p437) target = $region48
        $region47: #{feature_forward.1} parent=35 // pred_region
          %441 = vsyncadd %s434, 0
          %s442 = scalar_lea.hbm %s4, %s22
          %s444 = sshll.u32 %s436, 4
          %s445 = int_to_ptr.vmem [resolvable:$true] %s444
          %s446 = sshll.u32 %s442, 4
          %s447 = int_to_ptr.hbm [resolvable:$true] %s446
          %449 = dma.vmem_to_hbm [thread:$0]  %s445, 16, %s447, %s434
        $region48: #{feature_forward.1} parent=35 // pred_fallthru
          _
      $region36: #{feature_forward.1} parent=5 // pred_fallthru
        _
      %p450 = scmp.le.s32.totalorder 2, %s13
      // Predicated region
      $region49: #{feature_forward.1} parent=5 // pred_check
        %p451 = pneg %p450
      $region50: #{feature_forward.1} parent=5 // pred_check_branch
        %453 = sbr.rel (%p451) target = $region52
      $region51: #{feature_forward.1} parent=5 // pred_region
        %s454 = ssub.s32 %s13, 2
        // Predicated region
        $region53: #{feature_forward.1} parent=51 // pred_check
          %p455 = pneg %p152
        $region54: #{feature_forward.1} parent=51 // pred_check_branch
          %457 = sbr.rel (%p455) target = $region56
        $region55: #{feature_forward.1} parent=51 // pred_region
          %s458 = sand.u32 %s137, 1
          %s459 = scalar_lea.sflag [#allocation5], %s458
          %s460 = sand.u32 %s137, 1
          %s461 = scalar_lea.vmem [#allocation4], %s460
          %463 = dma.done %s459, 16
        $region56: #{feature_forward.1} parent=51 // pred_fallthru
          _
      $region52: #{feature_forward.1} parent=5 // pred_fallthru
        _
    $region6: #{feature_forward.1} parent=1 // loop_footer
      %s17 = sadd.s32 1, %s13
    $region7: #{feature_forward.1} parent=1 // loop_footer_branch
      %12 = sbr.rel target = $region3
    $region8: #{feature_forward.1} parent=1 // loop_exit
      _
    %464 = vsyncpa [#allocation5], 1
    %s465 = scalar_lea.sflag [#allocation5], 1
    %466 = vsyncpa %s465, 1

</llo_original>
